<compile_context>
chip_gen: v6e
topology: v6e:2x2x1
jax: 0.10.0
libtpu: 0.0.40
codegen_flags: <defaults>
</compile_context>

<pallas_src>
import jax
import jax.numpy as jnp
from jax.experimental import pallas as pl
from jax.experimental.pallas import tpu as pltpu


def _round_up(x, m):
    return ((x + m - 1) // m) * m


# --------------------------------------------------------------------------- #
# Kernel bodies
# --------------------------------------------------------------------------- #
def _make_clinear_kernel(has_bias: bool, acc_in_out: bool):
    """Kernel body. Ref order: x, Wt, [pb], out, [acc_scratch]."""
    if acc_in_out:
        # f32 output: accumulate directly into the VMEM-resident output block
        # (its index map ignores k), no scratch and no finalize copy.
        def kernel(*refs):
            if has_bias:
                x_ref, w_ref, pb_ref, o_ref = refs
            else:
                x_ref, w_ref, o_ref = refs
            k = pl.program_id(2)

            @pl.when(k == 0)
            def _init():
                o_ref[...] = jnp.zeros_like(o_ref)

            o_ref[...] += jnp.dot(x_ref[...], w_ref[...],
                                  preferred_element_type=jnp.float32)

            if has_bias:
                @pl.when(k == pl.num_programs(2) - 1)
                def _finalize():
                    o_ref[...] += pb_ref[...]  # [1, tn] broadcast over rows

        return kernel

    def kernel(*refs):
        if has_bias:
            x_ref, w_ref, pb_ref, o_ref, acc_ref = refs
        else:
            x_ref, w_ref, o_ref, acc_ref = refs
        k = pl.program_id(2)

        @pl.when(k == 0)
        def _init():
            acc_ref[...] = jnp.zeros_like(acc_ref)

        acc_ref[...] += jnp.dot(x_ref[...], w_ref[...],
                                preferred_element_type=jnp.float32)

        @pl.when(k == pl.num_programs(2) - 1)
        def _finalize():
            acc = acc_ref[...]
            if has_bias:
                acc = acc + pb_ref[...]
            o_ref[...] = acc.astype(o_ref.dtype)

    return kernel


# --------------------------------------------------------------------------- #
# pallas_call wrapper (operates on already padded / prepared operands)
# --------------------------------------------------------------------------- #
def _clinear_pallas(xp, Wtp, pbp, out_dtype, tm, tn, tk):
    Mp, Kp = xp.shape
    Kp2, Np = Wtp.shape
    assert Kp == Kp2
    has_bias = pbp is not None
    acc_in_out = jnp.dtype(out_dtype) == jnp.dtype(jnp.float32)

    in_specs = [
        pl.BlockSpec((tm, tk), lambda i, j, k: (i, k)),   # x tile   [tm, tk]
        pl.BlockSpec((tk, tn), lambda i, j, k: (k, j)),   # W.T tile [tk, tn]
    ]
    args = [xp, Wtp]
    if has_bias:
        in_specs.append(pl.BlockSpec((1, tn), lambda i, j, k: (0, j)))
        args.append(pbp)

    scratch = [] if acc_in_out else [pltpu.VMEM((tm, tn), jnp.float32)]

    grid = (Mp // tm, Np // tn, Kp // tk)

    in_size = jnp.dtype(xp.dtype).itemsize
    out_size = jnp.dtype(out_dtype).itemsize
    # Double-buffered input/output tiles (+ optional f32 scratch).
    vmem_need = (2 * (tm * tk + tk * tn) * in_size
                 + (2 * tn * 4 if has_bias else 0)
                 + 2 * tm * tn * out_size
                 + (0 if acc_in_out else tm * tn * 4))
    try:
        vmem_cap = int(pltpu.get_tpu_info().vmem_capacity_bytes)
    except Exception:
        vmem_cap = 64 * 1024 * 1024
    vmem_limit = int(min(max(2 * vmem_need, 32 * 1024 * 1024),
                         max(int(0.75 * vmem_cap), 2 * vmem_need)))

    flops = 2 * Mp * Np * Kp
    bytes_accessed = (Mp * Kp * in_size + Kp * Np * in_size
                      + Mp * Np * out_size + (Np * 4 if has_bias else 0))

    return pl.pallas_call(
        _make_clinear_kernel(has_bias, acc_in_out),
        out_shape=jax.ShapeDtypeStruct((Mp, Np), out_dtype),
        grid_spec=pltpu.PrefetchScalarGridSpec(
            num_scalar_prefetch=0,
            grid=grid,
            in_specs=in_specs,
            out_specs=pl.BlockSpec((tm, tn), lambda i, j, k: (i, j)),
            scratch_shapes=scratch,
        ),
        compiler_params=pltpu.CompilerParams(
            dimension_semantics=("parallel", "parallel", "arbitrary"),
            vmem_limit_bytes=vmem_limit,
        ),
        cost_estimate=pl.CostEstimate(
            flops=flops, transcendentals=0, bytes_accessed=bytes_accessed),
    )(*args)


# --------------------------------------------------------------------------- #
# Weight preparation (hoist this out of the per-call hot path)
# --------------------------------------------------------------------------- #
def prepare_clinear_weights(W, b=None, C_W=None, C_b=None, use_bias=True,
                            tn=256, tk=1024, compute_dtype=None):
    """One-time prep: PW = C_W*W, transpose to [K,N], pad, cast; pb = C_b*b.

    W: [N, K] (torch.nn.Linear.weight layout); C_W: [N, K] or None;
    b, C_b: [N] or None. Returns a dict consumed by clinear_apply().
    """
    N, K = W.shape
    compute_dtype = (jnp.dtype(compute_dtype) if compute_dtype is not None
                     else jnp.dtype(W.dtype))

    tn = max(128, min(tn, _round_up(N, 128)))
    tk = max(128, min(tk, _round_up(K, 128)))
    Np, Kp = _round_up(N, tn), _round_up(K, tk)

    PW = W if C_W is None else C_W * W          # single elementwise pass
    Wt = PW.T                                   # [K, N] -> canonical contraction
    if (Kp, Np) != (K, N):
        Wt = jnp.pad(Wt, ((0, Kp - K), (0, Np - N)))
    Wt = Wt.astype(compute_dtype)

    pb = None
    if use_bias:
        if b is None:
            raise ValueError("use_bias=True but b is None (PyTorch module would fail).")
        if C_W is not None:
            if C_b is None:
                raise ValueError("C_W given without C_b (PyTorch module computes C_b * b).")
            pb = (C_b * b).astype(jnp.float32)
        else:
            pb = b.astype(jnp.float32)
        if Np != N:
            pb = jnp.pad(pb, (0, Np - N))
        pb = pb.reshape(1, Np)

    return {"Wt": Wt, "pb": pb, "N": N, "K": K, "tn": tn, "tk": tk,
            "compute_dtype": compute_dtype}


def clinear_apply(x, prep, tm=256, out_dtype=None):
    """Hot path: pads only x, runs the kernel on prepared weights."""
    M, K = x.shape
    assert K == prep["K"], "inDim mismatch"
    out_dtype = jnp.dtype(out_dtype) if out_dtype is not None else jnp.dtype(x.dtype)

    tm = max(8, min(tm, _round_up(M, 8)))
    Mp = _round_up(M, tm)
    Kp = prep["Wt"].shape[0]

    xp = x
    if (Mp, Kp) != (M, K):
        xp = jnp.pad(x, ((0, Mp - M), (0, Kp - K)))
    xp = xp.astype(prep["compute_dtype"])

    out = _clinear_pallas(xp, prep["Wt"], prep["pb"], out_dtype,
                          tm, prep["tn"], prep["tk"])
    N = prep["N"]
    if out.shape != (M, N):
        out = out[:M, :N]
    return out


def clinear_forward(x, W, b=None, C_W=None, C_b=None, use_bias=True,
                    tm=256, tn=256, tk=1024, compute_dtype=None):
    """Convenience wrapper: prepares weights and applies in one call.

    For repeated inference, call prepare_clinear_weights() once and
    clinear_apply() per batch instead (avoids re-padding/re-masking weights).
    """
    M, K = x.shape
    N, K2 = W.shape
    assert K == K2, "inDim mismatch"

    # Clamp tiles, then guarantee >= 2 blocks on a parallel axis for v7x
    # megacore when the grid would otherwise collapse to (1, 1, K/tk).
    tm_c = max(8, min(tm, _round_up(M, 8)))
    tn_c = max(128, min(tn, _round_up(N, 128)))
    if (_round_up(M, tm_c) // tm_c == 1
            and _round_up(N, tn_c) // tn_c == 1
            and _round_up(N, 128) >= 256):
        tn_c = max(128, _round_up((N + 1) // 2, 128))

    prep = prepare_clinear_weights(W, b, C_W, C_b, use_bias,
                                   tn=tn_c, tk=tk, compute_dtype=compute_dtype)
    return clinear_apply(x, prep, tm=tm, out_dtype=x.dtype)


# --------------------------------------------------------------------------- #
# Parameter / mask init mirroring the PyTorch module
# --------------------------------------------------------------------------- #
def _init_linear_params(key, in_dim, out_dim):
    # nn.Linear default init: U(-1/sqrt(inDim), 1/sqrt(inDim)).
    kw, kb = jax.random.split(key)
    bound = 1.0 / jnp.sqrt(in_dim)
    W = jax.random.uniform(kw, (out_dim, in_dim), jnp.float32, -bound, bound)
    b = jax.random.uniform(kb, (out_dim,), jnp.float32, -bound, bound)
    return W, b


def _generate_random_mask(key, in_dim, out_dim, noise_scale):
    # Mirrors cLinear.generate_random_mask: CW ~ N(0, noise_scale) [inDim,outDim];
    # C_W = CW.T + 1 (-> [outDim, inDim]); C_b = Cb + 1.
    kcw, kcb = jax.random.split(key)
    if noise_scale == 0:
        CW = jnp.zeros((in_dim, out_dim), jnp.float32)
        Cb = jnp.zeros((out_dim,), jnp.float32)
    else:
        CW = noise_scale * jax.random.normal(kcw, (in_dim, out_dim), jnp.float32)
        Cb = noise_scale * jax.random.normal(kcb, (out_dim,), jnp.float32)
    return CW.T + 1.0, Cb + 1.0


if __name__ == "__main__":
    key = jax.random.PRNGKey(0)
    k_x, k_p, k_m, k_x2, k_p2, k_m2, k_x5, k_p5, k_m5, k_x5b = jax.random.split(key, 10)

    # --- Cases 1-3: tiny layer (N=16 padded to a lane-dense 128 inside) -------
    batch, in_dim, out_dim = 8, 32, 16
    x = jax.random.normal(k_x, (batch, in_dim), jnp.float32)
    W, b = _init_linear_params(k_p, in_dim, out_dim)
    C_W, C_b = _generate_random_mask(k_m, in_dim, out_dim, noise_scale=0.1)

    # 1) un-masked path (C_W is None in the PyTorch module)
    out_plain = jax.block_until_ready(clinear_forward(x, W, b))
    ref_plain = x @ W.T + b
    assert jnp.allclose(out_plain, ref_plain, atol=1e-5, rtol=1e-5)

    # 2) masked path (after generate_random_mask)
    out_masked = jax.block_until_ready(clinear_forward(x, W, b, C_W=C_W, C_b=C_b))
    ref_masked = x @ (C_W * W).T + (C_b * b)
    assert jnp.allclose(out_masked, ref_masked, atol=1e-5, rtol=1e-5)

    # 3) no-bias variant
    out_nb = jax.block_until_ready(
        clinear_forward(x, W, None, C_W=C_W, C_b=C_b, use_bias=False))
    ref_nb = x @ (C_W * W).T
    assert jnp.allclose(out_nb, ref_nb, atol=1e-5, rtol=1e-5)

    # --- Case 4: multi-tile grid exercising K accumulation and M/N padding ----
    batch2, in_dim2, out_dim2 = 48, 256, 192
    x2 = jax.random.normal(k_x2, (batch2, in_dim2), jnp.float32)
    W2, b2 = _init_linear_params(k_p2, in_dim2, out_dim2)
    C_W2, C_b2 = _generate_random_mask(k_m2, in_dim2, out_dim2, noise_scale=0.05)
    out2 = jax.block_until_ready(
        clinear_forward(x2, W2, b2, C_W=C_W2, C_b=C_b2, tm=32, tn=128, tk=128))
    ref2 = x2 @ (C_W2 * W2).T + (C_b2 * b2)
    assert jnp.allclose(out2, ref2, atol=1e-3, rtol=1e-3)

    # --- Case 5: bf16 compute path + weight prep hoisted out of the hot path ---
    batch5, in_dim5, out_dim5 = 128, 512, 384
    x5 = jax.random.normal(k_x5, (batch5, in_dim5), jnp.float32)
    x5b = jax.random.normal(k_x5b, (8, in_dim5), jnp.float32)
    W5, b5 = _init_linear_params(k_p5, in_dim5, out_dim5)
    C_W5, C_b5 = _generate_random_mask(k_m5, in_dim5, out_dim5, noise_scale=0.1)

    prep5 = prepare_clinear_weights(W5, b5, C_W=C_W5, C_b=C_b5, use_bias=True,
                                    tn=256, tk=1024, compute_dtype=jnp.bfloat16)
    out5 = jax.block_until_ready(clinear_apply(x5, prep5, tm=256))
    out5b = jax.block_until_ready(clinear_apply(x5b, prep5, tm=256))
    ref5 = x5 @ (C_W5 * W5).T + (C_b5 * b5)
    ref5b = x5b @ (C_W5 * W5).T + (C_b5 * b5)
    assert jnp.allclose(out5, ref5, atol=5e-2, rtol=5e-2)
    assert jnp.allclose(out5b, ref5b, atol=5e-2, rtol=5e-2)

    print("KERNEL_OK")
</pallas_src>

<mosaic_0001>
module attributes {stable_mosaic.version = 11 : i64} {
  func.func @kernel(%arg0: i32, %arg1: i32, %arg2: i32, %arg3: memref<8x128xf32, #tpu.memory_space<vmem>>, %arg4: memref<128x128xf32, #tpu.memory_space<vmem>>, %arg5: memref<1x128xf32, #tpu.memory_space<vmem>>, %arg6: memref<8x128xf32, #tpu.memory_space<vmem>>) attributes {dimension_semantics = [#tpu.dimension_semantics<parallel>, #tpu.dimension_semantics<parallel>, #tpu.dimension_semantics<arbitrary>], iteration_bounds = array<i64: 1, 1, 1>, scalar_prefetch = 0 : i64, scratch_operands = 0 : i64, tpu.core_type = #tpu.core_type<tc>, window_params = [{transform_indices = @transform_0, window_bounds = array<i64: 8, 128>}, {transform_indices = @transform_1, window_bounds = array<i64: 128, 128>}, {transform_indices = @transform_2, window_bounds = array<i64: 1, 128>}, {transform_indices = @transform_3, window_bounds = array<i64: 8, 128>}]} {
    %c0_i32 = arith.constant 0 : i32
    %0 = arith.cmpi eq, %arg2, %c0_i32 : i32
    %1 = arith.extui %0 : i1 to i32
    %c0_i32_0 = arith.constant 0 : i32
    %2 = arith.cmpi ne, %1, %c0_i32_0 : i32
    scf.if %2 {
      %cst_10 = arith.constant 0.000000e+00 : f32
      %12 = vector.broadcast %cst_10 : f32 to vector<8x128xf32>
      %c0_11 = arith.constant 0 : index
      %c0_12 = arith.constant 0 : index
      %13 = vector.load %arg6[%c0_11, %c0_12] : memref<8x128xf32, #tpu.memory_space<vmem>>, vector<8x128xf32>
      tpu.vector_store %arg6[%c0_11, %c0_12], %12 {strides = array<i32>} : memref<8x128xf32, #tpu.memory_space<vmem>>, vector<8x128xf32>,
    } else {
    }
    %c0 = arith.constant 0 : index
    %c0_1 = arith.constant 0 : index
    %3 = vector.load %arg6[%c0, %c0_1] : memref<8x128xf32, #tpu.memory_space<vmem>>, vector<8x128xf32>
    %c0_2 = arith.constant 0 : index
    %c0_3 = arith.constant 0 : index
    %4 = vector.load %arg3[%c0_2, %c0_3] : memref<8x128xf32, #tpu.memory_space<vmem>>, vector<8x128xf32>
    %c0_4 = arith.constant 0 : index
    %c0_5 = arith.constant 0 : index
    %5 = vector.load %arg4[%c0_4, %c0_5] : memref<128x128xf32, #tpu.memory_space<vmem>>, vector<128x128xf32>
    %cst = arith.constant dense<0.000000e+00> : vector<8x128xf32>
    %6 = tpu.matmul %4, %5, %cst {dimension_numbers = #tpu.dot_dimension_numbers<[1], [0], [0], [1], [0, 0, 1, 1], [], []>} : vector<8x128xf32>, vector<128x128xf32>, vector<8x128xf32> -> vector<8x128xf32>
    %7 = arith.addf %3, %6 : vector<8x128xf32>
    %c0_6 = arith.constant 0 : index
    %c0_7 = arith.constant 0 : index
    %8 = vector.load %arg6[%c0_6, %c0_7] : memref<8x128xf32, #tpu.memory_space<vmem>>, vector<8x128xf32>
    tpu.vector_store %arg6[%c0_6, %c0_7], %7 {strides = array<i32>} : memref<8x128xf32, #tpu.memory_space<vmem>>, vector<8x128xf32>,
    %c0_i32_8 = arith.constant 0 : i32
    %9 = arith.cmpi eq, %arg2, %c0_i32_8 : i32
    %10 = arith.extui %9 : i1 to i32
    %c0_i32_9 = arith.constant 0 : i32
    %11 = arith.cmpi ne, %10, %c0_i32_9 : i32
    scf.if %11 {
      %c0_10 = arith.constant 0 : index
      %c0_11 = arith.constant 0 : index
      %12 = vector.load %arg6[%c0_10, %c0_11] : memref<8x128xf32, #tpu.memory_space<vmem>>, vector<8x128xf32>
      %c0_12 = arith.constant 0 : index
      %c0_13 = arith.constant 0 : index
      %13 = vector.load %arg5[%c0_12, %c0_13] : memref<1x128xf32, #tpu.memory_space<vmem>>, vector<1x128xf32>
      %14 = vector.broadcast %13 : vector<1x128xf32> to vector<8x128xf32>
      %15 = arith.addf %12, %14 : vector<8x128xf32>
      %c0_14 = arith.constant 0 : index
      %c0_15 = arith.constant 0 : index
      %16 = vector.load %arg6[%c0_14, %c0_15] : memref<8x128xf32, #tpu.memory_space<vmem>>, vector<8x128xf32>
      tpu.vector_store %arg6[%c0_14, %c0_15], %15 {strides = array<i32>} : memref<8x128xf32, #tpu.memory_space<vmem>>, vector<8x128xf32>,
    } else {
    }
    return
  }
  func.func @transform_0(%arg0: i32, %arg1: i32, %arg2: i32) -> (i32, i32) {
    %c0_i32 = arith.constant 0 : i32
    return %arg0, %arg2 : i32, i32
  }
  func.func @transform_1(%arg0: i32, %arg1: i32, %arg2: i32) -> (i32, i32) {
    %c0_i32 = arith.constant 0 : i32
    return %arg2, %arg1 : i32, i32
  }
  func.func @transform_2(%arg0: i32, %arg1: i32, %arg2: i32) -> (i32, i32) {
    %c0_i32 = arith.constant 0 : i32
    %c0_i32_0 = arith.constant 0 : i32
    return %c0_i32, %arg1 : i32, i32
  }
  func.func @transform_3(%arg0: i32, %arg1: i32, %arg2: i32) -> (i32, i32) {
    %c0_i32 = arith.constant 0 : i32
    return %arg0, %arg1 : i32, i32
  }
}

</mosaic_0001>

<llo_original>
// kernel: tpu_custom_call.1
$region0: #{tpu_custom_call.1}
  #allocation0 [shape = 'u32[]', space=smem, size = 0x4, offset = 0x4, fixed_abs, tag = 'smem constant byte address 0x4 - core index']
  #allocation1 [shape = 'u32[144,128]{1,0:T(1,128)}', space=vmem, size = 0x12000, scoped, tag = 'internal scratch']
  %s0 = inlined_call_operand.hbm [shape: f32[8,128], index: 0, kind: input, shape index: {}]
  %s1 = inlined_call_operand.hbm [shape: f32[128,128], index: 1, kind: input, shape index: {}]
  %s2 = inlined_call_operand.vmem [shape: f32[1,128], index: 2, kind: input, shape index: {}]
  %s3 = inlined_call_operand.hbm [shape: f32[8,128], index: 3, kind: output, shape index: {}]
  %s4 = sld [smem:[#allocation0]]
  $region38: #{tpu_custom_call.1} parent=0
    _
  %s6 = ssub.s32 1, %s4
  %s7 = scalar_select 0, %s6, %s4
  $region1: #{tpu_custom_call.1} parent=0
    #allocation2 [shape = 'u8[4096]{0}', space=vmem, size = 0x1000, scoped, tag = 'input window, operand 0, single buffered']
    #allocation3 [shape = 's32[1]{0}', space=sflag, size = 0x4, scoped, tag = 'scoped memory for tpu_custom_call.1']
    #allocation4 [shape = 's32[1]{0}', space=sflag, size = 0x4, scoped, tag = 'scoped memory for tpu_custom_call.1']
    #allocation5 [shape = 'u8[65536]{0}', space=vmem, size = 0x10000, scoped, tag = 'input window, operand 1, single buffered']
    #allocation6 [shape = 's32[1]{0}', space=sflag, size = 0x4, scoped, tag = 'scoped memory for tpu_custom_call.1']
    #allocation7 [shape = 'u8[4096]{0}', space=vmem, size = 0x1000, scoped, tag = 'output window, operand 0, single buffered']
    %8 = vsyncpa [#allocation3], 0
    %9 = vsyncpa [#allocation6], 0
    %10 = vsyncpa [#allocation4], 0
    // Predicated region
    $region2: #{tpu_custom_call.1} parent=1 // pred_check
      _
    $region3: #{tpu_custom_call.1} parent=1 // pred_check_branch
      %12 = sbr.rel (0) target = $region5
    $region4: #{tpu_custom_call.1} parent=1 // pred_region
      %s14 = ssub.s32 128, 128
      %15 = vsyncadd [#allocation3], %s14
      %s17 = sshll.u32 [#allocation2], 4
      %s18 = int_to_ptr.vmem [resolvable:$true] %s17
      %20 = dma.hbm_to_vmem [thread:$0]  %s0, 128, %s18, [#allocation3]
    $region5: #{tpu_custom_call.1} parent=1 // pred_fallthru
      _
    // Predicated region
    $region6: #{tpu_custom_call.1} parent=1 // pred_check
      _
    $region7: #{tpu_custom_call.1} parent=1 // pred_check_branch
      %22 = sbr.rel (0) target = $region9
    $region8: #{tpu_custom_call.1} parent=1 // pred_region
      %s24 = ssub.s32 2048, 2048
      %25 = vsyncadd [#allocation6], %s24
      %s26 = sshll.u32 [#allocation5], 4
      %s27 = int_to_ptr.vmem [resolvable:$true] %s26
      %32 = dma.hbm_to_vmem [thread:$0]  %s1, 2048, %s27, [#allocation6], 128, 128, 8
    $region9: #{tpu_custom_call.1} parent=1 // pred_fallthru
      _
    // Predicated region
    $region10: #{tpu_custom_call.1} parent=1 // pred_check
      _
    $region11: #{tpu_custom_call.1} parent=1 // pred_check_branch
      %34 = sbr.rel (0) target = $region13
    $region12: #{tpu_custom_call.1} parent=1 // pred_region
      _
    $region13: #{tpu_custom_call.1} parent=1 // pred_fallthru
      _
    // Predicated region
    $region14: #{tpu_custom_call.1} parent=1 // pred_check
      _
    $region15: #{tpu_custom_call.1} parent=1 // pred_check_branch
      %36 = sbr.rel (0) target = $region17
    $region16: #{tpu_custom_call.1} parent=1 // pred_region
      %37 = dma.done [#allocation3], 128
    $region17: #{tpu_custom_call.1} parent=1 // pred_fallthru
      _
    // Predicated region
    $region18: #{tpu_custom_call.1} parent=1 // pred_check
      _
    $region19: #{tpu_custom_call.1} parent=1 // pred_check_branch
      %39 = sbr.rel (0) target = $region21
    $region20: #{tpu_custom_call.1} parent=1 // pred_region
      %40 = dma.done [#allocation6], 2048
    $region21: #{tpu_custom_call.1} parent=1 // pred_fallthru
      _
    %p41 = scmp.eq.s32.totalorder 0, 0
    // Predicated region
    $region22: #{tpu_custom_call.1} parent=1 // pred_check
      %p42 = pneg %p41
    $region23: #{tpu_custom_call.1} parent=1 // pred_check_branch
      %44 = sbr.rel (%p42) target = $region25
    $region24: #{tpu_custom_call.1} parent=1 // pred_region
      %45 = vst [vmem:[#allocation7] sm:$0xff] 0.0
    $region25: #{tpu_custom_call.1} parent=1 // pred_fallthru
      _
    %v46 = vld [vmem:[#allocation7] sm:$0xff]
    %v47 = vld [vmem:[#allocation2] sm:$0xff]
    %v48 = vld [vmem:[#allocation5] sm:$0xff]
    %v49 = vld [vmem:[#allocation5 + $0x8] sm:$0xff]
    %v50 = vld [vmem:[#allocation5 + $0x10] sm:$0xff]
    %v51 = vld [vmem:[#allocation5 + $0x18] sm:$0xff]
    %v52 = vld [vmem:[#allocation5 + $0x20] sm:$0xff]
    %v53 = vld [vmem:[#allocation5 + $0x28] sm:$0xff]
    %v54 = vld [vmem:[#allocation5 + $0x30] sm:$0xff]
    %v55 = vld [vmem:[#allocation5 + $0x38] sm:$0xff]
    %v56 = vld [vmem:[#allocation5 + $0x40] sm:$0xff]
    %v57 = vld [vmem:[#allocation5 + $0x48] sm:$0xff]
    %v58 = vld [vmem:[#allocation5 + $0x50] sm:$0xff]
    %v59 = vld [vmem:[#allocation5 + $0x58] sm:$0xff]
    %v60 = vld [vmem:[#allocation5 + $0x60] sm:$0xff]
    %v61 = vld [vmem:[#allocation5 + $0x68] sm:$0xff]
    %v62 = vld [vmem:[#allocation5 + $0x70] sm:$0xff]
    %v63 = vld [vmem:[#allocation5 + $0x78] sm:$0xff]
    %64 = vmatprep.subr.mxu0 0.0
    %65 = vmatpush1.msra.mxu0 %v63
    %66 = vmatprep.subr.mxu0 0.0
    %67 = vmatpush1.msra.mxu0 %v62
    %68 = vmatprep.subr.mxu0 0.0
    %69 = vmatpush1.msra.mxu0 %v61
    %70 = vmatprep.subr.mxu0 0.0
    %71 = vmatpush1.msra.mxu0 %v60
    %72 = vmatprep.subr.mxu0 0.0
    %73 = vmatpush1.msra.mxu0 %v59
    %74 = vmatprep.subr.mxu0 0.0
    %75 = vmatpush1.msra.mxu0 %v58
    %76 = vmatprep.subr.mxu0 0.0
    %77 = vmatpush1.msra.mxu0 %v57
    %78 = vmatprep.subr.mxu0 0.0
    %79 = vmatpush1.msra.mxu0 %v56
    %80 = vmatprep.subr.mxu0 0.0
    %81 = vmatpush1.msra.mxu0 %v55
    %82 = vmatprep.subr.mxu0 0.0
    %83 = vmatpush1.msra.mxu0 %v54
    %84 = vmatprep.subr.mxu0 0.0
    %85 = vmatpush1.msra.mxu0 %v53
    %86 = vmatprep.subr.mxu0 0.0
    %87 = vmatpush1.msra.mxu0 %v52
    %88 = vmatprep.subr.mxu0 0.0
    %89 = vmatpush1.msra.mxu0 %v51
    %90 = vmatprep.subr.mxu0 0.0
    %91 = vmatpush1.msra.mxu0 %v50
    %92 = vmatprep.subr.mxu0 0.0
    %93 = vmatpush1.msra.mxu0 %v49
    %94 = vmatprep.subr.mxu0 0.0
    %95 = vmatpush1.msra.mxu0 %v48
    %96 = vmatprep.subr.mxu0 0.0
    %97 = vmatpush2.msra.mxu0 0.0
    %98 = vmatprep.subr.mxu0 0.0
    %99 = vmatpush2.msra.mxu0 0.0
    %100 = vmatprep.subr.mxu0 0.0
    %101 = vmatpush2.msra.mxu0 0.0
    %102 = vmatprep.subr.mxu0 0.0
    %103 = vmatpush2.msra.mxu0 0.0
    %104 = vmatprep.subr.mxu0 0.0
    %105 = vmatpush2.msra.mxu0 0.0
    %106 = vmatprep.subr.mxu0 0.0
    %107 = vmatpush2.msra.mxu0 0.0
    %108 = vmatprep.subr.mxu0 0.0
    %109 = vmatpush2.msra.mxu0 0.0
    %110 = vmatprep.subr.mxu0 0.0
    %111 = vmatpush2.msra.mxu0 0.0
    %112 = vmatprep.subr.mxu0 0.0
    %113 = vmatpush2.msra.mxu0 0.0
    %114 = vmatprep.subr.mxu0 0.0
    %115 = vmatpush2.msra.mxu0 0.0
    %116 = vmatprep.subr.mxu0 0.0
    %117 = vmatpush2.msra.mxu0 0.0
    %118 = vmatprep.subr.mxu0 0.0
    %119 = vmatpush2.msra.mxu0 0.0
    %120 = vmatprep.subr.mxu0 0.0
    %121 = vmatpush2.msra.mxu0 0.0
    %122 = vmatprep.subr.mxu0 0.0
    %123 = vmatpush2.msra.mxu0 0.0
    %124 = vmatprep.subr.mxu0 0.0
    %125 = vmatpush2.msra.mxu0 0.0
    %126 = vmatprep.subr.mxu0 0.0
    %127 = vmatpush2.msra.mxu0 0.0
    %128 = vmatprep.mubr.f32.mxu0 0.0
    %129 = vmatmul.mubr.f32.gmra.mxu0 %v47
    %v130 = vpop.f32.mrf.mxu0
    %v131 = vadd.f32 0.0, %v130
    %v132 = vpop.f32.mrf.mxu0
    %133 = vdwg.mxu0
    %v134 = vadd.f32 %v46, %v131
    %135 = vst [vmem:[#allocation7] sm:$0xff] %v134
    // Predicated region
    $region26: #{tpu_custom_call.1} parent=1 // pred_check
      %p136 = pneg %p41
    $region27: #{tpu_custom_call.1} parent=1 // pred_check_branch
      %138 = sbr.rel (%p136) target = $region29
    $region28: #{tpu_custom_call.1} parent=1 // pred_region
      %v139 = vld [vmem:[#allocation7] sm:$0xff]
      %v140 = vld [vmem:[%s2] sm:$0x1]
      %v142 = vlaneseq
      %v143 = vshrl.u32 %v142, 7
      %v144 = vsub.s32 0, %v143
      %v145 = vrot.slane %v140, %v144
      %v147 = vadd.f32 %v139, %v145
      %148 = vst [vmem:[#allocation7] sm:$0xff] %v147
    $region29: #{tpu_custom_call.1} parent=1 // pred_fallthru
      _
    // Predicated region
    $region30: #{tpu_custom_call.1} parent=1 // pred_check
      _
    $region31: #{tpu_custom_call.1} parent=1 // pred_check_branch
      %150 = sbr.rel (0) target = $region33
    $region32: #{tpu_custom_call.1} parent=1 // pred_region
      %s152 = ssub.s32 128, 128
      %153 = vsyncadd [#allocation4], %s152
      %s155 = sshll.u32 [#allocation7], 4
      %s156 = int_to_ptr.vmem [resolvable:$true] %s155
      %158 = dma.vmem_to_hbm [thread:$0]  %s156, 128, %s3, [#allocation4]
    $region33: #{tpu_custom_call.1} parent=1 // pred_fallthru
      _
    // Predicated region
    $region34: #{tpu_custom_call.1} parent=1 // pred_check
      _
    $region35: #{tpu_custom_call.1} parent=1 // pred_check_branch
      %160 = sbr.rel (0) target = $region37
    $region36: #{tpu_custom_call.1} parent=1 // pred_region
      %161 = dma.done [#allocation4], 128
    $region37: #{tpu_custom_call.1} parent=1 // pred_fallthru
      _
    %162 = vsyncpa [#allocation3], 1
    %163 = vsyncpa [#allocation6], 1
    %164 = vsyncpa [#allocation4], 1

</llo_original>
